<compile_context>
chip_gen: v6e
topology: v6e:2x2x1
jax: 0.10.0
libtpu: 0.0.40
codegen_flags: <defaults>
</compile_context>

<pallas_src>
import jax
import jax.numpy as jnp
from jax.experimental import pallas as pl
from jax.experimental.pallas import tpu as pltpu

LEAKY_SLOPE = 0.01  # PyTorch nn.LeakyReLU default negative_slope


# ---------------------------------------------------------------------------
# Hardware-aware budgets
# ---------------------------------------------------------------------------
def _vmem_capacity_bytes():
    """Physical VMEM per core; conservative fallback if unknown."""
    try:
        info = pltpu.get_tpu_info()
        cap = getattr(info, "vmem_capacity_bytes", None)
        if cap:
            return int(cap)
    except Exception:
        pass
    return 64 << 20  # assume the smallest current part (v7x-like)


def _vmem_budgets():
    cap = _vmem_capacity_bytes()
    if cap >= (96 << 20):              # v5e / v6e: 128 MiB physical VMEM
        return 80 << 20, 100 << 20     # (tile/fused budget, vmem_limit_bytes)
    # v7x (64 MiB) and smaller/unknown parts: scale with capacity.
    vlimit = min(48 << 20, cap * 3 // 4)
    budget = min(40 << 20, cap * 5 // 8)
    return budget, vlimit


def _pick_hw_tile(hw, per_lane_bytes, budget):
    """Largest multiple of 128 lanes whose per-tile footprint fits `budget`.

    Prefers a tile that divides hw (no boundary masking); otherwise the last
    tile is partial and the kernels mask out-of-range lanes.
    """
    max_tile = (budget // max(per_lane_bytes, 1)) // 128 * 128
    # Note: for extreme channel counts even a 128-lane tile may exceed the
    # budget; 128 is the floor we can usefully go to with HW on the lane axis.
    max_tile = max(128, min(max_tile, hw))
    if max_tile >= hw:
        return hw, False
    best_div = 0
    t = max_tile
    while t >= 128:
        if hw % t == 0:
            best_div = t
            break
        t -= 128
    if best_div >= max(128, max_tile // 2):
        return best_div, False
    return max_tile, (hw % max_tile) != 0


# ---------------------------------------------------------------------------
# Fused single-pass kernel: `group` whole (C, HW) maps per grid step.
# feat read once, written once (2x HBM traffic).  Transform stays in-kernel.
# ---------------------------------------------------------------------------
def _make_fused_kernel(group):
    def kernel(feat_ref, w_attn_ref, b_attn_ref,
               w1_ref, b1_ref, w2_ref, b2_ref, out_ref):
        w_attn = w_attn_ref[...]            # (C, 1) f32
        b_attn = b_attn_ref[0, 0]           # scalar f32 (SMEM)
        w1 = w1_ref[...]
        b1 = b1_ref[...]
        w2 = w2_ref[...]
        b2 = b2_ref[...]
        for g in range(group):              # static unroll; group <= 8
            feat = feat_ref[g]                                   # (C, HW) native
            w_a = w_attn.astype(feat.dtype)
            # 1x1 conv to one channel: sublane (C) reduce on the VPU, f32 acc.
            scores = (jnp.sum(feat * w_a, axis=0, keepdims=True,
                              dtype=jnp.float32) + b_attn)       # (1, HW)
            # softmax over spatial (lane) axis
            m = jnp.max(scores, axis=1, keepdims=True)           # (1, 1)
            e = jnp.exp(scores - m)                              # (1, HW) f32
            l = jnp.sum(e, axis=1, keepdims=True)                # (1, 1)
            # ctx = feat @ attn : lane reduce, f32 acc, divide once on C-vector
            ctx = (jnp.sum(feat * e.astype(feat.dtype), axis=1, keepdims=True,
                           dtype=jnp.float32) * (1.0 / l))       # (C, 1)
            # global_transform: two 1x1 convs + LeakyReLU (tiny, per map)
            h1 = jnp.dot(w1, ctx, preferred_element_type=jnp.float32) + b1
            h1 = jnp.where(h1 >= 0, h1, LEAKY_SLOPE * h1)
            h2 = jnp.dot(w2, h1, preferred_element_type=jnp.float32) + b2
            h2 = jnp.where(h2 >= 0, h2, LEAKY_SLOPE * h2)        # (C, 1)
            # residual add with spatial (lane) broadcast, in input dtype
            out_ref[g] = feat + h2.astype(feat.dtype)
    return kernel


# ---------------------------------------------------------------------------
# Tiled pass 1: online-softmax accumulation of ctx over HW tiles.
# Output: ctx of shape (B, C, 1) in f32.  No CxC weights in this pass.
# ---------------------------------------------------------------------------
def _make_ctx_kernel(hw, hw_tile, needs_mask):
    def kernel(feat_ref, w_attn_ref, b_attn_ref, ctx_ref, m_sc, l_sc, acc_sc):
        t = pl.program_id(1)

        @pl.when(t == 0)
        def _():
            m_sc[...] = jnp.full_like(m_sc, -jnp.inf)
            l_sc[...] = jnp.zeros_like(l_sc)
            acc_sc[...] = jnp.zeros_like(acc_sc)

        feat = feat_ref[0]                                       # (C, hw_tile)
        w_a = w_attn_ref[...].astype(feat.dtype)                 # (C, 1)
        scores = (jnp.sum(feat * w_a, axis=0, keepdims=True,
                          dtype=jnp.float32) + b_attn_ref[0, 0]) # (1, hw_tile)

        if needs_mask:
            lane = jax.lax.broadcasted_iota(jnp.int32, scores.shape, 1)
            valid = (t * hw_tile + lane) < hw
            scores = jnp.where(valid, scores, -jnp.inf)

        m_prev = m_sc[...]
        m_new = jnp.maximum(m_prev, jnp.max(scores, axis=1, keepdims=True))
        # Guard: at t==0 (or if everything so far was masked) m_prev = -inf and
        # the accumulators are zero, so the rescale factor must be 0, not NaN.
        alpha = jnp.where(jnp.isfinite(m_prev), jnp.exp(m_prev - m_new), 0.0)
        e = jnp.exp(scores - m_new)                              # (1, hw_tile)

        contrib = feat * e.astype(feat.dtype)                    # (C, hw_tile)
        if needs_mask:
            contrib = jnp.where(valid, contrib, 0)               # kill OOB junk

        l_sc[...] = alpha * l_sc[...] + jnp.sum(e, axis=1, keepdims=True)
        acc_sc[...] = (alpha * acc_sc[...]
                       + jnp.sum(contrib, axis=1, keepdims=True,
                                 dtype=jnp.float32))
        m_sc[...] = m_new

        @pl.when(t == pl.num_programs(1) - 1)
        def _():
            ctx_ref[0] = acc_sc[...] * (1.0 / l_sc[...])         # (C, 1) f32
    return kernel


# ---------------------------------------------------------------------------
# Tiled pass 2: fully parallel residual broadcast-add (streaming, lane-dense).
# h2 is pre-cast to feat's dtype in the wrapper.
# ---------------------------------------------------------------------------
def _residual_kernel(feat_ref, h2_ref, out_ref):
    out_ref[0] = feat_ref[0] + h2_ref[0]          # (C,1) broadcast over lanes


# ---------------------------------------------------------------------------
# Wrapper
# ---------------------------------------------------------------------------
def nonlocal_attention_block(feat_nchw, params, *, hw_tile=None, donate=False):
    """feat_nchw: (B, C, H, W).  Returns (B, C, H, W)."""
    b, c, h, w = feat_nchw.shape
    hw = h * w
    dtype = feat_nchw.dtype
    itemsize = jnp.dtype(dtype).itemsize

    # NCHW -> (B, C, HW): pure reshape, no transpose copy. HW on the lane axis.
    feat = feat_nchw.reshape(b, c, hw)

    w_attn = params["w_attn"].reshape(c, 1).astype(jnp.float32)   # (C, 1)
    b_attn = params["b_attn"].reshape(1, 1).astype(jnp.float32)   # (1, 1) -> SMEM
    w1 = params["w1"].astype(jnp.float32)                         # (C_out, C_in)
    w2 = params["w2"].astype(jnp.float32)

    budget, vlimit = _vmem_budgets()
    smem_spec = pl.BlockSpec(memory_space=pltpu.MemorySpace.SMEM)
    io_alias = {0: 0} if donate else {}

    map_bytes = c * hw * itemsize
    # Fused path per-map footprint: 2x in + 2x out double buffers (native) plus
    # ~2 full-size compute temps (f32-sized to stay conservative) + f32 rows.
    fused_per_map = map_bytes * 4 + c * hw * 8 + hw * 8
    # Pass-1 holds the (double-buffered) CxC weights only on the fused path now.
    weights_vmem = 2 * (2 * c * c * 4) + 8 * c * 4 + (64 << 10)

    use_fused = (hw_tile is None) and (fused_per_map + weights_vmem <= budget)

    if use_fused:
        b1 = params["b1"].reshape(c, 1).astype(jnp.float32)
        b2 = params["b2"].reshape(c, 1).astype(jnp.float32)

        # Tiny maps (small C * HW): pack several batch images per grid step to
        # amortize the ~0.35 us per-step overhead and issue bigger DMAs.
        group = 1
        if map_bytes <= (1 << 20):
            for cand in (8, 4, 2):
                if b % cand == 0 and cand * fused_per_map + weights_vmem <= budget:
                    group = cand
                    break

        out = pl.pallas_call(
            _make_fused_kernel(group),
            out_shape=jax.ShapeDtypeStruct((b, c, hw), dtype),
            grid=(b // group,),
            in_specs=[
                pl.BlockSpec((group, c, hw), lambda i: (i, 0, 0)),  # feat
                pl.BlockSpec((c, 1), lambda i: (0, 0)),             # w_attn
                smem_spec,                                          # b_attn
                pl.BlockSpec((c, c), lambda i: (0, 0)),             # w1
                pl.BlockSpec((c, 1), lambda i: (0, 0)),             # b1
                pl.BlockSpec((c, c), lambda i: (0, 0)),             # w2
                pl.BlockSpec((c, 1), lambda i: (0, 0)),             # b2
            ],
            out_specs=pl.BlockSpec((group, c, hw), lambda i: (i, 0, 0)),
            compiler_params=pltpu.CompilerParams(
                dimension_semantics=("parallel",),
                vmem_limit_bytes=vlimit),
            cost_estimate=pl.CostEstimate(
                flops=int(5 * b * c * hw + 4 * b * c * c),
                transcendentals=int(b * hw),
                bytes_accessed=int(2 * b * c * hw * itemsize)),
            input_output_aliases=io_alias,
        )(feat, w_attn, b_attn, w1, b1, w2, b2)
        return out.reshape(b, c, h, w)

    # ------------------- tiled two-pass (large HW*C) ------------------------
    # Per-tile footprint of the streaming passes: in/out double buffers in the
    # native dtype plus ~one f32-sized compute temp per lane-column.
    per_lane = c * (itemsize * 4 + 4) + 16
    if hw_tile is None:
        hw_tile, needs_mask = _pick_hw_tile(hw, per_lane, budget)
    else:
        hw_tile = int(hw_tile)
        if hw_tile >= hw:
            hw_tile = hw
        else:
            hw_tile = min(hw, max(128, (hw_tile // 128) * 128))
        needs_mask = (hw % hw_tile) != 0
    num_t = -(-hw // hw_tile)

    # Pass 1: ctx via online softmax over HW tiles -> (B, C, 1) f32.
    ctx = pl.pallas_call(
        _make_ctx_kernel(hw, hw_tile, needs_mask),
        out_shape=jax.ShapeDtypeStruct((b, c, 1), jnp.float32),
        grid=(b, num_t),
        in_specs=[
            pl.BlockSpec((1, c, hw_tile), lambda i, t: (i, 0, t)),   # feat tile
            pl.BlockSpec((c, 1), lambda i, t: (0, 0)),               # w_attn
            smem_spec,                                               # b_attn
        ],
        out_specs=pl.BlockSpec((1, c, 1), lambda i, t: (i, 0, 0)),
        scratch_shapes=[
            pltpu.VMEM((1, 1), jnp.float32),   # running max m
            pltpu.VMEM((1, 1), jnp.float32),   # running denom l
            pltpu.VMEM((c, 1), jnp.float32),   # running weighted sum acc
        ],
        compiler_params=pltpu.CompilerParams(
            dimension_semantics=("parallel", "arbitrary"),
            vmem_limit_bytes=vlimit),
        cost_estimate=pl.CostEstimate(
            flops=int(4 * b * c * hw),
            transcendentals=int(b * hw),
            bytes_accessed=int(b * c * hw * itemsize)),
    )(feat, w_attn, b_attn)

    # Hoisted global_transform: one batched (B,C)@(C,C) matmul pair in plain
    # XLA (tiny; MXU-friendly shape), instead of per-tile N=1 matmuls in VMEM.
    b1_row = params["b1"].reshape(1, c).astype(jnp.float32)
    b2_row = params["b2"].reshape(1, c).astype(jnp.float32)
    ctx2 = ctx[:, :, 0]                                              # (B, C)
    h1 = ctx2 @ w1.T + b1_row
    h1 = jnp.where(h1 >= 0, h1, LEAKY_SLOPE * h1)
    h2 = h1 @ w2.T + b2_row
    h2 = jnp.where(h2 >= 0, h2, LEAKY_SLOPE * h2)                    # (B, C)
    h2 = h2.astype(dtype).reshape(b, c, 1)                           # feat dtype

    # Pass 2: fully parallel residual broadcast-add (streaming).
    out = pl.pallas_call(
        _residual_kernel,
        out_shape=jax.ShapeDtypeStruct((b, c, hw), dtype),
        grid=(b, num_t),
        in_specs=[
            pl.BlockSpec((1, c, hw_tile), lambda i, t: (i, 0, t)),
            pl.BlockSpec((1, c, 1), lambda i, t: (i, 0, 0)),
        ],
        out_specs=pl.BlockSpec((1, c, hw_tile), lambda i, t: (i, 0, t)),
        compiler_params=pltpu.CompilerParams(
            dimension_semantics=("parallel", "parallel"),
            vmem_limit_bytes=vlimit),
        cost_estimate=pl.CostEstimate(
            flops=int(b * c * hw),
            transcendentals=0,
            bytes_accessed=int(2 * b * c * hw * itemsize)),
        input_output_aliases=io_alias,
    )(feat, h2)

    return out.reshape(b, c, h, w)


# ---------------------------------------------------------------------------
# Pure-JAX reference matching the PyTorch forward exactly.
# ---------------------------------------------------------------------------
def reference(feat_nchw, params):
    b, c, h, w = feat_nchw.shape
    x = feat_nchw.reshape(b, c, h * w)                               # (b, c, hw)
    scores = (jnp.einsum("bcs,c->bs", x, params["w_attn"].reshape(c))
              + params["b_attn"].reshape(()))                        # (b, hw)
    attn = jax.nn.softmax(scores, axis=1)
    ctx = jnp.einsum("bcs,bs->bc", x, attn)                          # (b, c)
    h1 = ctx @ params["w1"].T + params["b1"]
    h1 = jnp.where(h1 >= 0, h1, LEAKY_SLOPE * h1)
    h2 = h1 @ params["w2"].T + params["b2"]
    h2 = jnp.where(h2 >= 0, h2, LEAKY_SLOPE * h2)                    # (b, c)
    return feat_nchw + h2[:, :, None, None]


def init_params(key, c):
    k0, k1, k2, k3, k4, k5 = jax.random.split(key, 6)
    scale = 1.0 / jnp.sqrt(c)
    return {
        # Conv2d(C -> 1, 1x1): weight (1, C, 1, 1) stored as (C, 1)
        "w_attn": jax.random.normal(k0, (c, 1), jnp.float32) * scale,
        "b_attn": jax.random.normal(k1, (1,), jnp.float32) * scale,
        # Conv2d(C -> C, 1x1): weight stored as (C_out, C_in) so y = x @ W.T + b
        "w1": jax.random.normal(k2, (c, c), jnp.float32) * scale,
        "b1": jax.random.normal(k3, (c,), jnp.float32) * scale,
        "w2": jax.random.normal(k4, (c, c), jnp.float32) * scale,
        "b2": jax.random.normal(k5, (c,), jnp.float32) * scale,
    }


if __name__ == "__main__":
    key = jax.random.PRNGKey(0)
    k_feat, k_feat2, k_params = jax.random.split(key, 3)

    B, C, H, W = 2, 4, 16, 16
    feat = jax.random.normal(k_feat, (B, C, H, W), jnp.float32)
    params = init_params(k_params, C)
    ref = reference(feat, params)

    # Fused single-pass path (auto-selected; batch-grouped for tiny C maps).
    out_fused = jax.block_until_ready(nonlocal_attention_block(feat, params))
    assert out_fused.shape == (B, C, H, W)
    assert jnp.allclose(out_fused, ref, atol=2e-5, rtol=1e-5), "fused mismatch"

    # Tiled two-pass path (online softmax, clean 128-lane tiles).
    out_tiled = jax.block_until_ready(
        nonlocal_attention_block(feat, params, hw_tile=128))
    assert jnp.allclose(out_tiled, ref, atol=2e-5, rtol=1e-5), "tiled mismatch"

    # Tiled path with a partial (masked) boundary tile: HW = 18*18 = 324.
    feat_odd = jax.random.normal(k_feat2, (B, C, 18, 18), jnp.float32)
    ref_odd = reference(feat_odd, params)
    out_odd = jax.block_until_ready(
        nonlocal_attention_block(feat_odd, params, hw_tile=128))
    assert jnp.allclose(out_odd, ref_odd, atol=2e-5, rtol=1e-5), "masked-tile mismatch"

    print("KERNEL_OK")
</pallas_src>

<mosaic_0001>
module attributes {stable_mosaic.version = 11 : i64} {
  func.func @kernel(%arg0: i32, %arg1: memref<2x4x256xf32, #tpu.memory_space<vmem>>, %arg2: memref<4x1xf32, #tpu.memory_space<vmem>>, %arg3: memref<1x1xf32, #tpu.memory_space<smem>>, %arg4: memref<4x4xf32, #tpu.memory_space<vmem>>, %arg5: memref<4x1xf32, #tpu.memory_space<vmem>>, %arg6: memref<4x4xf32, #tpu.memory_space<vmem>>, %arg7: memref<4x1xf32, #tpu.memory_space<vmem>>, %arg8: memref<2x4x256xf32, #tpu.memory_space<vmem>>) attributes {dimension_semantics = [#tpu.dimension_semantics<parallel>], iteration_bounds = array<i64: 1>, scalar_prefetch = 0 : i64, scratch_operands = 0 : i64, tpu.core_type = #tpu.core_type<tc>, window_params = [{transform_indices = @transform_0, window_bounds = array<i64: 2, 4, 256>}, {pipeline_mode = #tpu.pipeline_mode<synchronous>, transform_indices = @transform_1, window_bounds = array<i64: 4, 1>}, {transform_indices = @transform_2, window_bounds = array<i64: 1, 1>}, {pipeline_mode = #tpu.pipeline_mode<synchronous>, transform_indices = @transform_3, window_bounds = array<i64: 4, 4>}, {pipeline_mode = #tpu.pipeline_mode<synchronous>, transform_indices = @transform_4, window_bounds = array<i64: 4, 1>}, {pipeline_mode = #tpu.pipeline_mode<synchronous>, transform_indices = @transform_5, window_bounds = array<i64: 4, 4>}, {pipeline_mode = #tpu.pipeline_mode<synchronous>, transform_indices = @transform_6, window_bounds = array<i64: 4, 1>}, {transform_indices = @transform_7, window_bounds = array<i64: 2, 4, 256>}]} {
    %c0 = arith.constant 0 : index
    %c0_0 = arith.constant 0 : index
    %0 = vector.load %arg2[%c0, %c0_0] : memref<4x1xf32, #tpu.memory_space<vmem>>, vector<4x1xf32>
    %c0_1 = arith.constant 0 : index
    %c0_2 = arith.constant 0 : index
    %1 = memref.load %arg3[%c0_1, %c0_2] : memref<1x1xf32, #tpu.memory_space<smem>>
    %c0_3 = arith.constant 0 : index
    %c0_4 = arith.constant 0 : index
    %2 = vector.load %arg4[%c0_3, %c0_4] : memref<4x4xf32, #tpu.memory_space<vmem>>, vector<4x4xf32>
    %c0_5 = arith.constant 0 : index
    %c0_6 = arith.constant 0 : index
    %3 = vector.load %arg5[%c0_5, %c0_6] : memref<4x1xf32, #tpu.memory_space<vmem>>, vector<4x1xf32>
    %c0_7 = arith.constant 0 : index
    %c0_8 = arith.constant 0 : index
    %4 = vector.load %arg6[%c0_7, %c0_8] : memref<4x4xf32, #tpu.memory_space<vmem>>, vector<4x4xf32>
    %c0_9 = arith.constant 0 : index
    %c0_10 = arith.constant 0 : index
    %5 = vector.load %arg7[%c0_9, %c0_10] : memref<4x1xf32, #tpu.memory_space<vmem>>, vector<4x1xf32>
    %c0_11 = arith.constant 0 : index
    %c0_12 = arith.constant 0 : index
    %c0_13 = arith.constant 0 : index
    %6 = vector.load %arg1[%c0_11, %c0_12, %c0_13] : memref<2x4x256xf32, #tpu.memory_space<vmem>>, vector<1x4x256xf32>
    %7 = vector.shape_cast %6 : vector<1x4x256xf32> to vector<4x256xf32>
    %8 = vector.broadcast %0 : vector<4x1xf32> to vector<4x256xf32>
    %9 = arith.mulf %7, %8 : vector<4x256xf32>
    %cst = arith.constant dense<0.000000e+00> : vector<256xf32>
    %10 = vector.multi_reduction <add>, %9, %cst [0] : vector<4x256xf32> to vector<256xf32>
    %11 = vector.shape_cast %10 : vector<256xf32> to vector<1x256xf32>
    %12 = vector.broadcast %1 : f32 to vector<1x256xf32>
    %13 = arith.addf %11, %12 : vector<1x256xf32>
    %cst_14 = arith.constant dense<0xFF800000> : vector<1xf32>
    %14 = vector.multi_reduction <maximumf>, %13, %cst_14 [1] : vector<1x256xf32> to vector<1xf32>
    %15 = vector.shape_cast %14 : vector<1xf32> to vector<1x1xf32>
    %16 = vector.broadcast %15 : vector<1x1xf32> to vector<1x256xf32>
    %17 = arith.subf %13, %16 : vector<1x256xf32>
    %18 = math.exp %17 : vector<1x256xf32>
    %cst_15 = arith.constant dense<0.000000e+00> : vector<1xf32>
    %19 = vector.multi_reduction <add>, %18, %cst_15 [1] : vector<1x256xf32> to vector<1xf32>
    %20 = vector.shape_cast %19 : vector<1xf32> to vector<1x1xf32>
    %21 = vector.broadcast %18 : vector<1x256xf32> to vector<4x256xf32>
    %22 = arith.mulf %7, %21 : vector<4x256xf32>
    %cst_16 = arith.constant dense<0.000000e+00> : vector<4xf32>
    %23 = vector.multi_reduction <add>, %22, %cst_16 [1] : vector<4x256xf32> to vector<4xf32>
    %24 = vector.shape_cast %23 : vector<4xf32> to vector<4x1xf32>
    %cst_17 = arith.constant 1.000000e+00 : f32
    %25 = vector.broadcast %cst_17 : f32 to vector<1x1xf32>
    %26 = arith.divf %25, %20 : vector<1x1xf32>
    %27 = vector.broadcast %26 : vector<1x1xf32> to vector<4x1xf32>
    %28 = arith.mulf %24, %27 : vector<4x1xf32>
    %cst_18 = arith.constant dense<0.000000e+00> : vector<4x1xf32>
    %29 = tpu.matmul %2, %28, %cst_18 {dimension_numbers = #tpu.dot_dimension_numbers<[1], [0], [0], [1], [0, 0, 1, 1], [], []>} : vector<4x4xf32>, vector<4x1xf32>, vector<4x1xf32> -> vector<4x1xf32>
    %30 = arith.addf %29, %3 : vector<4x1xf32>
    %cst_19 = arith.constant 0.000000e+00 : f32
    %31 = vector.broadcast %cst_19 : f32 to vector<4x1xf32>
    %32 = arith.cmpf oge, %30, %31 : vector<4x1xf32>
    %cst_20 = arith.constant 0.00999999977 : f32
    %33 = vector.broadcast %cst_20 : f32 to vector<4x1xf32>
    %34 = arith.mulf %33, %30 : vector<4x1xf32>
    %35 = arith.select %32, %30, %34 : vector<4x1xi1>, vector<4x1xf32>
    %cst_21 = arith.constant dense<0.000000e+00> : vector<4x1xf32>
    %36 = tpu.matmul %4, %35, %cst_21 {dimension_numbers = #tpu.dot_dimension_numbers<[1], [0], [0], [1], [0, 0, 1, 1], [], []>} : vector<4x4xf32>, vector<4x1xf32>, vector<4x1xf32> -> vector<4x1xf32>
    %37 = arith.addf %36, %5 : vector<4x1xf32>
    %cst_22 = arith.constant 0.000000e+00 : f32
    %38 = vector.broadcast %cst_22 : f32 to vector<4x1xf32>
    %39 = arith.cmpf oge, %37, %38 : vector<4x1xf32>
    %cst_23 = arith.constant 0.00999999977 : f32
    %40 = vector.broadcast %cst_23 : f32 to vector<4x1xf32>
    %41 = arith.mulf %40, %37 : vector<4x1xf32>
    %42 = arith.select %39, %37, %41 : vector<4x1xi1>, vector<4x1xf32>
    %43 = vector.broadcast %42 : vector<4x1xf32> to vector<4x256xf32>
    %44 = arith.addf %7, %43 : vector<4x256xf32>
    %c0_24 = arith.constant 0 : index
    %c0_25 = arith.constant 0 : index
    %c0_26 = arith.constant 0 : index
    %45 = vector.load %arg8[%c0_24, %c0_25, %c0_26] : memref<2x4x256xf32, #tpu.memory_space<vmem>>, vector<1x4x256xf32>
    %46 = vector.shape_cast %45 : vector<1x4x256xf32> to vector<4x256xf32>
    %47 = vector.shape_cast %44 : vector<4x256xf32> to vector<1x4x256xf32>
    tpu.vector_store %arg8[%c0_24, %c0_25, %c0_26], %47 {strides = array<i32>} : memref<2x4x256xf32, #tpu.memory_space<vmem>>, vector<1x4x256xf32>,
    %c1 = arith.constant 1 : index
    %c0_27 = arith.constant 0 : index
    %c0_28 = arith.constant 0 : index
    %48 = vector.load %arg1[%c1, %c0_27, %c0_28] : memref<2x4x256xf32, #tpu.memory_space<vmem>>, vector<1x4x256xf32>
    %49 = vector.shape_cast %48 : vector<1x4x256xf32> to vector<4x256xf32>
    %50 = vector.broadcast %0 : vector<4x1xf32> to vector<4x256xf32>
    %51 = arith.mulf %49, %50 : vector<4x256xf32>
    %cst_29 = arith.constant dense<0.000000e+00> : vector<256xf32>
    %52 = vector.multi_reduction <add>, %51, %cst_29 [0] : vector<4x256xf32> to vector<256xf32>
    %53 = vector.shape_cast %52 : vector<256xf32> to vector<1x256xf32>
    %54 = vector.broadcast %1 : f32 to vector<1x256xf32>
    %55 = arith.addf %53, %54 : vector<1x256xf32>
    %cst_30 = arith.constant dense<0xFF800000> : vector<1xf32>
    %56 = vector.multi_reduction <maximumf>, %55, %cst_30 [1] : vector<1x256xf32> to vector<1xf32>
    %57 = vector.shape_cast %56 : vector<1xf32> to vector<1x1xf32>
    %58 = vector.broadcast %57 : vector<1x1xf32> to vector<1x256xf32>
    %59 = arith.subf %55, %58 : vector<1x256xf32>
    %60 = math.exp %59 : vector<1x256xf32>
    %cst_31 = arith.constant dense<0.000000e+00> : vector<1xf32>
    %61 = vector.multi_reduction <add>, %60, %cst_31 [1] : vector<1x256xf32> to vector<1xf32>
    %62 = vector.shape_cast %61 : vector<1xf32> to vector<1x1xf32>
    %63 = vector.broadcast %60 : vector<1x256xf32> to vector<4x256xf32>
    %64 = arith.mulf %49, %63 : vector<4x256xf32>
    %cst_32 = arith.constant dense<0.000000e+00> : vector<4xf32>
    %65 = vector.multi_reduction <add>, %64, %cst_32 [1] : vector<4x256xf32> to vector<4xf32>
    %66 = vector.shape_cast %65 : vector<4xf32> to vector<4x1xf32>
    %cst_33 = arith.constant 1.000000e+00 : f32
    %67 = vector.broadcast %cst_33 : f32 to vector<1x1xf32>
    %68 = arith.divf %67, %62 : vector<1x1xf32>
    %69 = vector.broadcast %68 : vector<1x1xf32> to vector<4x1xf32>
    %70 = arith.mulf %66, %69 : vector<4x1xf32>
    %cst_34 = arith.constant dense<0.000000e+00> : vector<4x1xf32>
    %71 = tpu.matmul %2, %70, %cst_34 {dimension_numbers = #tpu.dot_dimension_numbers<[1], [0], [0], [1], [0, 0, 1, 1], [], []>} : vector<4x4xf32>, vector<4x1xf32>, vector<4x1xf32> -> vector<4x1xf32>
    %72 = arith.addf %71, %3 : vector<4x1xf32>
    %cst_35 = arith.constant 0.000000e+00 : f32
    %73 = vector.broadcast %cst_35 : f32 to vector<4x1xf32>
    %74 = arith.cmpf oge, %72, %73 : vector<4x1xf32>
    %cst_36 = arith.constant 0.00999999977 : f32
    %75 = vector.broadcast %cst_36 : f32 to vector<4x1xf32>
    %76 = arith.mulf %75, %72 : vector<4x1xf32>
    %77 = arith.select %74, %72, %76 : vector<4x1xi1>, vector<4x1xf32>
    %cst_37 = arith.constant dense<0.000000e+00> : vector<4x1xf32>
    %78 = tpu.matmul %4, %77, %cst_37 {dimension_numbers = #tpu.dot_dimension_numbers<[1], [0], [0], [1], [0, 0, 1, 1], [], []>} : vector<4x4xf32>, vector<4x1xf32>, vector<4x1xf32> -> vector<4x1xf32>
    %79 = arith.addf %78, %5 : vector<4x1xf32>
    %cst_38 = arith.constant 0.000000e+00 : f32
    %80 = vector.broadcast %cst_38 : f32 to vector<4x1xf32>
    %81 = arith.cmpf oge, %79, %80 : vector<4x1xf32>
    %cst_39 = arith.constant 0.00999999977 : f32
    %82 = vector.broadcast %cst_39 : f32 to vector<4x1xf32>
    %83 = arith.mulf %82, %79 : vector<4x1xf32>
    %84 = arith.select %81, %79, %83 : vector<4x1xi1>, vector<4x1xf32>
    %85 = vector.broadcast %84 : vector<4x1xf32> to vector<4x256xf32>
    %86 = arith.addf %49, %85 : vector<4x256xf32>
    %c1_40 = arith.constant 1 : index
    %c0_41 = arith.constant 0 : index
    %c0_42 = arith.constant 0 : index
    %87 = vector.load %arg8[%c1_40, %c0_41, %c0_42] : memref<2x4x256xf32, #tpu.memory_space<vmem>>, vector<1x4x256xf32>
    %88 = vector.shape_cast %87 : vector<1x4x256xf32> to vector<4x256xf32>
    %89 = vector.shape_cast %86 : vector<4x256xf32> to vector<1x4x256xf32>
    tpu.vector_store %arg8[%c1_40, %c0_41, %c0_42], %89 {strides = array<i32>} : memref<2x4x256xf32, #tpu.memory_space<vmem>>, vector<1x4x256xf32>,
    return
  }
  func.func @transform_0(%arg0: i32) -> (i32, i32, i32) {
    %c0_i32 = arith.constant 0 : i32
    %c0_i32_0 = arith.constant 0 : i32
    %c0_i32_1 = arith.constant 0 : i32
    return %arg0, %c0_i32, %c0_i32_0 : i32, i32, i32
  }
  func.func @transform_1(%arg0: i32) -> (i32, i32) {
    %c0_i32 = arith.constant 0 : i32
    %c0_i32_0 = arith.constant 0 : i32
    %c0_i32_1 = arith.constant 0 : i32
    return %c0_i32, %c0_i32_0 : i32, i32
  }
  func.func @transform_2(%arg0: i32) -> (i32, i32) {
    %c0_i32 = arith.constant 0 : i32
    %c0_i32_0 = arith.constant 0 : i32
    %c0_i32_1 = arith.constant 0 : i32
    return %c0_i32, %c0_i32_0 : i32, i32
  }
  func.func @transform_3(%arg0: i32) -> (i32, i32) {
    %c0_i32 = arith.constant 0 : i32
    %c0_i32_0 = arith.constant 0 : i32
    %c0_i32_1 = arith.constant 0 : i32
    return %c0_i32, %c0_i32_0 : i32, i32
  }
  func.func @transform_4(%arg0: i32) -> (i32, i32) {
    %c0_i32 = arith.constant 0 : i32
    %c0_i32_0 = arith.constant 0 : i32
    %c0_i32_1 = arith.constant 0 : i32
    return %c0_i32, %c0_i32_0 : i32, i32
  }
  func.func @transform_5(%arg0: i32) -> (i32, i32) {
    %c0_i32 = arith.constant 0 : i32
    %c0_i32_0 = arith.constant 0 : i32
    %c0_i32_1 = arith.constant 0 : i32
    return %c0_i32, %c0_i32_0 : i32, i32
  }
  func.func @transform_6(%arg0: i32) -> (i32, i32) {
    %c0_i32 = arith.constant 0 : i32
    %c0_i32_0 = arith.constant 0 : i32
    %c0_i32_1 = arith.constant 0 : i32
    return %c0_i32, %c0_i32_0 : i32, i32
  }
  func.func @transform_7(%arg0: i32) -> (i32, i32, i32) {
    %c0_i32 = arith.constant 0 : i32
    %c0_i32_0 = arith.constant 0 : i32
    %c0_i32_1 = arith.constant 0 : i32
    return %arg0, %c0_i32, %c0_i32_0 : i32, i32, i32
  }
}

</mosaic_0001>

<llo_original>
// kernel: tpu_custom_call.1
$region0: #{tpu_custom_call.1}
  #allocation0 [shape = 'u32[]', space=smem, size = 0x4, offset = 0x4, fixed_abs, tag = 'smem constant byte address 0x4 - core index']
  #allocation1 [shape = 'u32[144,128]{1,0:T(1,128)}', space=vmem, size = 0x12000, scoped, tag = 'internal scratch']
  #allocation2 [shape = 'f32[1,1]{1,0:T(1,128)S(6)}', space=smem, size = 0x200, scoped, tag = 'scoped memory for tpu_custom_call.1']
  %s0 = inlined_call_operand.vmem [shape: f32[2,4,256], index: 0, kind: input, shape index: {}]
  %s1 = inlined_call_operand.vmem [shape: f32[4,1], index: 1, kind: input, shape index: {}]
  %s2 = inlined_call_operand.<no memory space> [shape: f32[1,1], index: 2, kind: input, shape index: {}]
  %s3 = inlined_call_operand.vmem [shape: f32[4,4], index: 3, kind: input, shape index: {}]
  %s4 = inlined_call_operand.vmem [shape: f32[4,1], index: 4, kind: input, shape index: {}]
  %s5 = inlined_call_operand.vmem [shape: f32[4,4], index: 5, kind: input, shape index: {}]
  %s6 = inlined_call_operand.vmem [shape: f32[4,1], index: 6, kind: input, shape index: {}]
  %s7 = inlined_call_operand.hbm [shape: f32[2,4,256], index: 7, kind: output, shape index: {}]
  %s8 = sld [smem:[#allocation0]]
  $region38: #{tpu_custom_call.1} parent=0
    _
  %s10 = ssub.s32 1, %s8
  %s11 = scalar_select 0, %s10, %s8
  %12 = sst [smem:[#allocation2]] %s2
  $region1: #{tpu_custom_call.1} parent=0
    #allocation3 [shape = 'u8[8192]{0}', space=vmem, size = 0x2000, scoped, tag = 'output window, operand 0, single buffered']
    #allocation4 [shape = 's32[1]{0}', space=sflag, size = 0x4, scoped, tag = 'scoped memory for tpu_custom_call.1']
    %13 = vsyncpa [#allocation4], 0
    // Predicated region
    $region2: #{tpu_custom_call.1} parent=1 // pred_check
      _
    $region3: #{tpu_custom_call.1} parent=1 // pred_check_branch
      %15 = sbr.rel (0) target = $region5
    $region4: #{tpu_custom_call.1} parent=1 // pred_region
      _
    $region5: #{tpu_custom_call.1} parent=1 // pred_fallthru
      _
    // Predicated region
    $region6: #{tpu_custom_call.1} parent=1 // pred_check
      _
    $region7: #{tpu_custom_call.1} parent=1 // pred_check_branch
      %17 = sbr.rel (0) target = $region9
    $region8: #{tpu_custom_call.1} parent=1 // pred_region
      _
    $region9: #{tpu_custom_call.1} parent=1 // pred_fallthru
      _
    // Predicated region
    $region10: #{tpu_custom_call.1} parent=1 // pred_check
      _
    $region11: #{tpu_custom_call.1} parent=1 // pred_check_branch
      %19 = sbr.rel (0) target = $region13
    $region12: #{tpu_custom_call.1} parent=1 // pred_region
      _
    $region13: #{tpu_custom_call.1} parent=1 // pred_fallthru
      _
    // Predicated region
    $region14: #{tpu_custom_call.1} parent=1 // pred_check
      _
    $region15: #{tpu_custom_call.1} parent=1 // pred_check_branch
      %21 = sbr.rel (0) target = $region17
    $region16: #{tpu_custom_call.1} parent=1 // pred_region
      _
    $region17: #{tpu_custom_call.1} parent=1 // pred_fallthru
      _
    // Predicated region
    $region18: #{tpu_custom_call.1} parent=1 // pred_check
      _
    $region19: #{tpu_custom_call.1} parent=1 // pred_check_branch
      %23 = sbr.rel (0) target = $region21
    $region20: #{tpu_custom_call.1} parent=1 // pred_region
      _
    $region21: #{tpu_custom_call.1} parent=1 // pred_fallthru
      _
    // Predicated region
    $region22: #{tpu_custom_call.1} parent=1 // pred_check
      _
    $region23: #{tpu_custom_call.1} parent=1 // pred_check_branch
      %25 = sbr.rel (0) target = $region25
    $region24: #{tpu_custom_call.1} parent=1 // pred_region
      _
    $region25: #{tpu_custom_call.1} parent=1 // pred_fallthru
      _
    // Predicated region
    $region26: #{tpu_custom_call.1} parent=1 // pred_check
      _
    $region27: #{tpu_custom_call.1} parent=1 // pred_check_branch
      %27 = sbr.rel (0) target = $region29
    $region28: #{tpu_custom_call.1} parent=1 // pred_region
      _
    $region29: #{tpu_custom_call.1} parent=1 // pred_fallthru
      _
    %v28 = vld [vmem:[%s1] sm:$0xf]
    %s29 = sld [smem:[#allocation2]]
    %v30 = vld [vmem:[%s3] sm:$0xf]
    %v31 = vld [vmem:[%s4] sm:$0xf]
    %v32 = vld [vmem:[%s5] sm:$0xf]
    %v33 = vld [vmem:[%s6] sm:$0xf]
    %v34 = vld [vmem:[%s0] sm:$0xff]
    %36 = vset.pattern.permute.xlu0 0
    %37 = vperm.xlu0 %36, %v28
    %v38 = vpop.permute.xlu0 %37
    %v40 = vunpack.c.l.s4 839922192
    %v41 = vunpack.c.0.s8 %v40
    %v42 = vlaneseq
    %v43 = vshrl.u32 %v42, 7
    %v44 = vsub.s32 %v41, %v43
    %v45 = vrot.slane %v38, %v44
    %v47 = vmul.f32 %v34, %v45
    %v49 = vcombine.high %v47, %v47
    %vm51 = vcmask 1043456
    %v52 = vsel %vm51, %v47, 0.0
    %v53 = vrot.slane %v52, 4
    %v54 = vadd.f32 %v52, %v53
    %v55 = vrot.slane %v54, 2
    %v56 = vadd.f32 %v54, %v55
    %v57 = vrot.slane %v56, 1
    %v58 = vadd.f32 %v56, %v57
    %v59 = vsel %vm51, %v49, 0.0
    %v60 = vrot.slane %v59, 4
    %v61 = vadd.f32 %v59, %v60
    %v62 = vrot.slane %v61, 2
    %v63 = vadd.f32 %v61, %v62
    %v64 = vrot.slane %v63, 1
    %v65 = vadd.f32 %v63, %v64
    %v66 = vstv %s29
    %v67 = vadd.f32 %v58, %v66
    %v68 = vadd.f32 %v65, %v66
    %v69 = vmax.f32 %v67, %v68
    %70 = vmax.xlane.f32.xlu0 %v69
    %v71 = vpop.xlane.xlu0 %70
    %v72 = vsub.f32 %v67, %v71
    %v73 = vsub.f32 %v68, %v71
    %v74 = vmul.f32 %v72, 1.442695
    %v75 = vpow.pop %v74
    %v76 = vmul.f32 %v73, 1.442695
    %v77 = vpow.pop %v76
    %v78 = vadd.f32 %v75, %v77
    %79 = vadd.xlane.f32.xlu0 %v78
    %v80 = vpop.xlane.xlu0 %79
    %v83 = vcombine.low %v75, %v77
    %v85 = vmul.f32 %v34, %v83
    %v87 = vcombine.high %v85, %v85
    %v89 = vsel %vm51, %v85, 0.0
    %v90 = vsel %vm51, %v87, 0.0
    %v91 = vadd.f32 %v89, %v90
    %92 = vadd.xlane.f32.xlu0 %v91
    %v93 = vpop.xlane.xlu0 %92
    %v94 = vrcp.pop %v80
    %v95 = vmul.f32 1.0, %v94
    %v96 = vmul.f32 %v93, %v95
    %vm97 = vcmask 31744
    %v99 = vsel %vm97, %v30, 0
    %v102 = vsel %vm51, %v96, 0
    %104 = vmatprep.subr.mxu0 0.0
    %105 = vmatpush1.msra.mxu0 0.0
    %106 = vmatprep.subr.mxu0 0.0
    %107 = vmatpush1.msra.mxu0 0.0
    %108 = vmatprep.subr.mxu0 0.0
    %109 = vmatpush1.msra.mxu0 0.0
    %110 = vmatprep.subr.mxu0 0.0
    %111 = vmatpush1.msra.mxu0 0.0
    %112 = vmatprep.subr.mxu0 0.0
    %113 = vmatpush1.msra.mxu0 0.0
    %114 = vmatprep.subr.mxu0 0.0
    %115 = vmatpush1.msra.mxu0 0.0
    %116 = vmatprep.subr.mxu0 0.0
    %117 = vmatpush1.msra.mxu0 0.0
    %118 = vmatprep.subr.mxu0 0.0
    %119 = vmatpush1.msra.mxu0 0.0
    %120 = vmatprep.subr.mxu0 0.0
    %121 = vmatpush1.msra.mxu0 0.0
    %122 = vmatprep.subr.mxu0 0.0
    %123 = vmatpush1.msra.mxu0 0.0
    %124 = vmatprep.subr.mxu0 0.0
    %125 = vmatpush1.msra.mxu0 0.0
    %126 = vmatprep.subr.mxu0 0.0
    %127 = vmatpush1.msra.mxu0 0.0
    %128 = vmatprep.subr.mxu0 0.0
    %129 = vmatpush1.msra.mxu0 0.0
    %130 = vmatprep.subr.mxu0 0.0
    %131 = vmatpush1.msra.mxu0 0.0
    %132 = vmatprep.subr.mxu0 0.0
    %133 = vmatpush1.msra.mxu0 0.0
    %134 = vmatprep.subr.mxu0 0.0
    %135 = vmatpush1.msra.mxu0 %v102
    %136 = vmatprep.subr.mxu0 0.0
    %137 = vmatpush2.msra.mxu0 0.0
    %138 = vmatprep.subr.mxu0 0.0
    %139 = vmatpush2.msra.mxu0 0.0
    %140 = vmatprep.subr.mxu0 0.0
    %141 = vmatpush2.msra.mxu0 0.0
    %142 = vmatprep.subr.mxu0 0.0
    %143 = vmatpush2.msra.mxu0 0.0
    %144 = vmatprep.subr.mxu0 0.0
    %145 = vmatpush2.msra.mxu0 0.0
    %146 = vmatprep.subr.mxu0 0.0
    %147 = vmatpush2.msra.mxu0 0.0
    %148 = vmatprep.subr.mxu0 0.0
    %149 = vmatpush2.msra.mxu0 0.0
    %150 = vmatprep.subr.mxu0 0.0
    %151 = vmatpush2.msra.mxu0 0.0
    %152 = vmatprep.subr.mxu0 0.0
    %153 = vmatpush2.msra.mxu0 0.0
    %154 = vmatprep.subr.mxu0 0.0
    %155 = vmatpush2.msra.mxu0 0.0
    %156 = vmatprep.subr.mxu0 0.0
    %157 = vmatpush2.msra.mxu0 0.0
    %158 = vmatprep.subr.mxu0 0.0
    %159 = vmatpush2.msra.mxu0 0.0
    %160 = vmatprep.subr.mxu0 0.0
    %161 = vmatpush2.msra.mxu0 0.0
    %162 = vmatprep.subr.mxu0 0.0
    %163 = vmatpush2.msra.mxu0 0.0
    %164 = vmatprep.subr.mxu0 0.0
    %165 = vmatpush2.msra.mxu0 0.0
    %166 = vmatprep.subr.mxu0 0.0
    %167 = vmatpush2.msra.mxu0 0.0
    %168 = vmatprep.mubr.f32.mxu0 0.0
    %169 = vmatmul.mubr.f32.gmra.mxu0 %v99
    %v170 = vpop.f32.mrf.mxu0
    %v171 = vadd.f32 %v31, %v170
    %v172 = vpop.f32.mrf.mxu0
    %173 = vdwg.mxu0
    %vm174 = vcmp.ge.f32.partialorder %v171, 0.0
    %v175 = vmul.f32 %v171, 0.01
    %v176 = vsel %vm174, %v171, %v175
    %v178 = vsel %vm97, %v32, 0
    %v181 = vsel %vm51, %v176, 0
    %183 = vmatprep.subr.mxu0 0.0
    %184 = vmatpush1.msra.mxu0 0.0
    %185 = vmatprep.subr.mxu0 0.0
    %186 = vmatpush1.msra.mxu0 0.0
    %187 = vmatprep.subr.mxu0 0.0
    %188 = vmatpush1.msra.mxu0 0.0
    %189 = vmatprep.subr.mxu0 0.0
    %190 = vmatpush1.msra.mxu0 0.0
    %191 = vmatprep.subr.mxu0 0.0
    %192 = vmatpush1.msra.mxu0 0.0
    %193 = vmatprep.subr.mxu0 0.0
    %194 = vmatpush1.msra.mxu0 0.0
    %195 = vmatprep.subr.mxu0 0.0
    %196 = vmatpush1.msra.mxu0 0.0
    %197 = vmatprep.subr.mxu0 0.0
    %198 = vmatpush1.msra.mxu0 0.0
    %199 = vmatprep.subr.mxu0 0.0
    %200 = vmatpush1.msra.mxu0 0.0
    %201 = vmatprep.subr.mxu0 0.0
    %202 = vmatpush1.msra.mxu0 0.0
    %203 = vmatprep.subr.mxu0 0.0
    %204 = vmatpush1.msra.mxu0 0.0
    %205 = vmatprep.subr.mxu0 0.0
    %206 = vmatpush1.msra.mxu0 0.0
    %207 = vmatprep.subr.mxu0 0.0
    %208 = vmatpush1.msra.mxu0 0.0
    %209 = vmatprep.subr.mxu0 0.0
    %210 = vmatpush1.msra.mxu0 0.0
    %211 = vmatprep.subr.mxu0 0.0
    %212 = vmatpush1.msra.mxu0 0.0
    %213 = vmatprep.subr.mxu0 0.0
    %214 = vmatpush1.msra.mxu0 %v181
    %215 = vmatprep.subr.mxu0 0.0
    %216 = vmatpush2.msra.mxu0 0.0
    %217 = vmatprep.subr.mxu0 0.0
    %218 = vmatpush2.msra.mxu0 0.0
    %219 = vmatprep.subr.mxu0 0.0
    %220 = vmatpush2.msra.mxu0 0.0
    %221 = vmatprep.subr.mxu0 0.0
    %222 = vmatpush2.msra.mxu0 0.0
    %223 = vmatprep.subr.mxu0 0.0
    %224 = vmatpush2.msra.mxu0 0.0
    %225 = vmatprep.subr.mxu0 0.0
    %226 = vmatpush2.msra.mxu0 0.0
    %227 = vmatprep.subr.mxu0 0.0
    %228 = vmatpush2.msra.mxu0 0.0
    %229 = vmatprep.subr.mxu0 0.0
    %230 = vmatpush2.msra.mxu0 0.0
    %231 = vmatprep.subr.mxu0 0.0
    %232 = vmatpush2.msra.mxu0 0.0
    %233 = vmatprep.subr.mxu0 0.0
    %234 = vmatpush2.msra.mxu0 0.0
    %235 = vmatprep.subr.mxu0 0.0
    %236 = vmatpush2.msra.mxu0 0.0
    %237 = vmatprep.subr.mxu0 0.0
    %238 = vmatpush2.msra.mxu0 0.0
    %239 = vmatprep.subr.mxu0 0.0
    %240 = vmatpush2.msra.mxu0 0.0
    %241 = vmatprep.subr.mxu0 0.0
    %242 = vmatpush2.msra.mxu0 0.0
    %243 = vmatprep.subr.mxu0 0.0
    %244 = vmatpush2.msra.mxu0 0.0
    %245 = vmatprep.subr.mxu0 0.0
    %246 = vmatpush2.msra.mxu0 0.0
    %247 = vmatprep.mubr.f32.mxu0 0.0
    %248 = vmatmul.mubr.f32.gmra.mxu0 %v178
    %v249 = vpop.f32.mrf.mxu0
    %v250 = vadd.f32 %v33, %v249
    %v251 = vpop.f32.mrf.mxu0
    %252 = vdwg.mxu0
    %vm253 = vcmp.ge.f32.partialorder %v250, 0.0
    %v254 = vmul.f32 %v250, 0.01
    %v255 = vsel %vm253, %v250, %v254
    %257 = vset.pattern.permute.xlu0 0
    %258 = vperm.xlu0 %257, %v255
    %v259 = vpop.permute.xlu0 %258
    %v261 = vunpack.c.l.s4 839922192
    %v262 = vunpack.c.0.s8 %v261
    %v263 = vlaneseq
    %v264 = vshrl.u32 %v263, 7
    %v265 = vsub.s32 %v262, %v264
    %v266 = vrot.slane %v259, %v265
    %v268 = vadd.f32 %v34, %v266
    %269 = vst [vmem:[#allocation3] sm:$0xff] %v268
    %s270 = scalar_lea.vmem %s0, 8
    %v271 = vld [vmem:[%s270] sm:$0xff]
    %v272 = vmul.f32 %v271, %v45
    %v274 = vcombine.high %v272, %v272
    %v276 = vsel %vm51, %v272, 0.0
    %v277 = vrot.slane %v276, 4
    %v278 = vadd.f32 %v276, %v277
    %v279 = vrot.slane %v278, 2
    %v280 = vadd.f32 %v278, %v279
    %v281 = vrot.slane %v280, 1
    %v282 = vadd.f32 %v280, %v281
    %v283 = vsel %vm51, %v274, 0.0
    %v284 = vrot.slane %v283, 4
    %v285 = vadd.f32 %v283, %v284
    %v286 = vrot.slane %v285, 2
    %v287 = vadd.f32 %v285, %v286
    %v288 = vrot.slane %v287, 1
    %v289 = vadd.f32 %v287, %v288
    %v290 = vadd.f32 %v282, %v66
    %v291 = vadd.f32 %v289, %v66
    %v292 = vmax.f32 %v290, %v291
    %293 = vmax.xlane.f32.xlu0 %v292
    %v294 = vpop.xlane.xlu0 %293
    %v295 = vsub.f32 %v290, %v294
    %v296 = vsub.f32 %v291, %v294
    %v297 = vmul.f32 %v295, 1.442695
    %v298 = vpow.pop %v297
    %v299 = vmul.f32 %v296, 1.442695
    %v300 = vpow.pop %v299
    %v301 = vadd.f32 %v298, %v300
    %302 = vadd.xlane.f32.xlu0 %v301
    %v303 = vpop.xlane.xlu0 %302
    %v306 = vcombine.low %v298, %v300
    %v308 = vmul.f32 %v271, %v306
    %v310 = vcombine.high %v308, %v308
    %v312 = vsel %vm51, %v308, 0.0
    %v313 = vsel %vm51, %v310, 0.0
    %v314 = vadd.f32 %v312, %v313
    %315 = vadd.xlane.f32.xlu0 %v314
    %v316 = vpop.xlane.xlu0 %315
    %v317 = vrcp.pop %v303
    %v318 = vmul.f32 1.0, %v317
    %v319 = vmul.f32 %v316, %v318
    %v321 = vsel %vm51, %v319, 0
    %323 = vmatprep.subr.mxu0 0.0
    %324 = vmatpush1.msra.mxu0 0.0
    %325 = vmatprep.subr.mxu0 0.0
    %326 = vmatpush1.msra.mxu0 0.0
    %327 = vmatprep.subr.mxu0 0.0
    %328 = vmatpush1.msra.mxu0 0.0
    %329 = vmatprep.subr.mxu0 0.0
    %330 = vmatpush1.msra.mxu0 0.0
    %331 = vmatprep.subr.mxu0 0.0
    %332 = vmatpush1.msra.mxu0 0.0
    %333 = vmatprep.subr.mxu0 0.0
    %334 = vmatpush1.msra.mxu0 0.0
    %335 = vmatprep.subr.mxu0 0.0
    %336 = vmatpush1.msra.mxu0 0.0
    %337 = vmatprep.subr.mxu0 0.0
    %338 = vmatpush1.msra.mxu0 0.0
    %339 = vmatprep.subr.mxu0 0.0
    %340 = vmatpush1.msra.mxu0 0.0
    %341 = vmatprep.subr.mxu0 0.0
    %342 = vmatpush1.msra.mxu0 0.0
    %343 = vmatprep.subr.mxu0 0.0
    %344 = vmatpush1.msra.mxu0 0.0
    %345 = vmatprep.subr.mxu0 0.0
    %346 = vmatpush1.msra.mxu0 0.0
    %347 = vmatprep.subr.mxu0 0.0
    %348 = vmatpush1.msra.mxu0 0.0
    %349 = vmatprep.subr.mxu0 0.0
    %350 = vmatpush1.msra.mxu0 0.0
    %351 = vmatprep.subr.mxu0 0.0
    %352 = vmatpush1.msra.mxu0 0.0
    %353 = vmatprep.subr.mxu0 0.0
    %354 = vmatpush1.msra.mxu0 %v321
    %355 = vmatprep.subr.mxu0 0.0
    %356 = vmatpush2.msra.mxu0 0.0
    %357 = vmatprep.subr.mxu0 0.0
    %358 = vmatpush2.msra.mxu0 0.0
    %359 = vmatprep.subr.mxu0 0.0
    %360 = vmatpush2.msra.mxu0 0.0
    %361 = vmatprep.subr.mxu0 0.0
    %362 = vmatpush2.msra.mxu0 0.0
    %363 = vmatprep.subr.mxu0 0.0
    %364 = vmatpush2.msra.mxu0 0.0
    %365 = vmatprep.subr.mxu0 0.0
    %366 = vmatpush2.msra.mxu0 0.0
    %367 = vmatprep.subr.mxu0 0.0
    %368 = vmatpush2.msra.mxu0 0.0
    %369 = vmatprep.subr.mxu0 0.0
    %370 = vmatpush2.msra.mxu0 0.0
    %371 = vmatprep.subr.mxu0 0.0
    %372 = vmatpush2.msra.mxu0 0.0
    %373 = vmatprep.subr.mxu0 0.0
    %374 = vmatpush2.msra.mxu0 0.0
    %375 = vmatprep.subr.mxu0 0.0
    %376 = vmatpush2.msra.mxu0 0.0
    %377 = vmatprep.subr.mxu0 0.0
    %378 = vmatpush2.msra.mxu0 0.0
    %379 = vmatprep.subr.mxu0 0.0
    %380 = vmatpush2.msra.mxu0 0.0
    %381 = vmatprep.subr.mxu0 0.0
    %382 = vmatpush2.msra.mxu0 0.0
    %383 = vmatprep.subr.mxu0 0.0
    %384 = vmatpush2.msra.mxu0 0.0
    %385 = vmatprep.subr.mxu0 0.0
    %386 = vmatpush2.msra.mxu0 0.0
    %387 = vmatprep.mubr.f32.mxu0 0.0
    %388 = vmatmul.mubr.f32.gmra.mxu0 %v99
    %v389 = vpop.f32.mrf.mxu0
    %v390 = vadd.f32 %v31, %v389
    %v391 = vpop.f32.mrf.mxu0
    %392 = vdwg.mxu0
    %vm393 = vcmp.ge.f32.partialorder %v390, 0.0
    %v394 = vmul.f32 %v390, 0.01
    %v395 = vsel %vm393, %v390, %v394
    %v397 = vsel %vm51, %v395, 0
    %399 = vmatprep.subr.mxu0 0.0
    %400 = vmatpush1.msra.mxu0 0.0
    %401 = vmatprep.subr.mxu0 0.0
    %402 = vmatpush1.msra.mxu0 0.0
    %403 = vmatprep.subr.mxu0 0.0
    %404 = vmatpush1.msra.mxu0 0.0
    %405 = vmatprep.subr.mxu0 0.0
    %406 = vmatpush1.msra.mxu0 0.0
    %407 = vmatprep.subr.mxu0 0.0
    %408 = vmatpush1.msra.mxu0 0.0
    %409 = vmatprep.subr.mxu0 0.0
    %410 = vmatpush1.msra.mxu0 0.0
    %411 = vmatprep.subr.mxu0 0.0
    %412 = vmatpush1.msra.mxu0 0.0
    %413 = vmatprep.subr.mxu0 0.0
    %414 = vmatpush1.msra.mxu0 0.0
    %415 = vmatprep.subr.mxu0 0.0
    %416 = vmatpush1.msra.mxu0 0.0
    %417 = vmatprep.subr.mxu0 0.0
    %418 = vmatpush1.msra.mxu0 0.0
    %419 = vmatprep.subr.mxu0 0.0
    %420 = vmatpush1.msra.mxu0 0.0
    %421 = vmatprep.subr.mxu0 0.0
    %422 = vmatpush1.msra.mxu0 0.0
    %423 = vmatprep.subr.mxu0 0.0
    %424 = vmatpush1.msra.mxu0 0.0
    %425 = vmatprep.subr.mxu0 0.0
    %426 = vmatpush1.msra.mxu0 0.0
    %427 = vmatprep.subr.mxu0 0.0
    %428 = vmatpush1.msra.mxu0 0.0
    %429 = vmatprep.subr.mxu0 0.0
    %430 = vmatpush1.msra.mxu0 %v397
    %431 = vmatprep.subr.mxu0 0.0
    %432 = vmatpush2.msra.mxu0 0.0
    %433 = vmatprep.subr.mxu0 0.0
    %434 = vmatpush2.msra.mxu0 0.0
    %435 = vmatprep.subr.mxu0 0.0
    %436 = vmatpush2.msra.mxu0 0.0
    %437 = vmatprep.subr.mxu0 0.0
    %438 = vmatpush2.msra.mxu0 0.0
    %439 = vmatprep.subr.mxu0 0.0
    %440 = vmatpush2.msra.mxu0 0.0
    %441 = vmatprep.subr.mxu0 0.0
    %442 = vmatpush2.msra.mxu0 0.0
    %443 = vmatprep.subr.mxu0 0.0
    %444 = vmatpush2.msra.mxu0 0.0
    %445 = vmatprep.subr.mxu0 0.0
    %446 = vmatpush2.msra.mxu0 0.0
    %447 = vmatprep.subr.mxu0 0.0
    %448 = vmatpush2.msra.mxu0 0.0
    %449 = vmatprep.subr.mxu0 0.0
    %450 = vmatpush2.msra.mxu0 0.0
    %451 = vmatprep.subr.mxu0 0.0
    %452 = vmatpush2.msra.mxu0 0.0
    %453 = vmatprep.subr.mxu0 0.0
    %454 = vmatpush2.msra.mxu0 0.0
    %455 = vmatprep.subr.mxu0 0.0
    %456 = vmatpush2.msra.mxu0 0.0
    %457 = vmatprep.subr.mxu0 0.0
    %458 = vmatpush2.msra.mxu0 0.0
    %459 = vmatprep.subr.mxu0 0.0
    %460 = vmatpush2.msra.mxu0 0.0
    %461 = vmatprep.subr.mxu0 0.0
    %462 = vmatpush2.msra.mxu0 0.0
    %463 = vmatprep.mubr.f32.mxu0 0.0
    %464 = vmatmul.mubr.f32.gmra.mxu0 %v178
    %v465 = vpop.f32.mrf.mxu0
    %v466 = vadd.f32 %v33, %v465
    %v467 = vpop.f32.mrf.mxu0
    %468 = vdwg.mxu0
    %vm469 = vcmp.ge.f32.partialorder %v466, 0.0
    %v470 = vmul.f32 %v466, 0.01
    %v471 = vsel %vm469, %v466, %v470
    %473 = vset.pattern.permute.xlu0 0
    %474 = vperm.xlu0 %473, %v471
    %v475 = vpop.permute.xlu0 %474
    %v477 = vunpack.c.l.s4 839922192
    %v478 = vunpack.c.0.s8 %v477
    %v479 = vlaneseq
    %v480 = vshrl.u32 %v479, 7
    %v481 = vsub.s32 %v478, %v480
    %v482 = vrot.slane %v475, %v481
    %v484 = vadd.f32 %v271, %v482
    %s485 = scalar_lea.vmem [#allocation3], 8
    %486 = vst [vmem:[%s485] sm:$0xff] %v484
    // Predicated region
    $region30: #{tpu_custom_call.1} parent=1 // pred_check
      _
    $region31: #{tpu_custom_call.1} parent=1 // pred_check_branch
      %488 = sbr.rel (0) target = $region33
    $region32: #{tpu_custom_call.1} parent=1 // pred_region
      %s490 = ssub.s32 256, 256
      %491 = vsyncadd [#allocation4], %s490
      %s492 = sshll.u32 [#allocation3], 4
      %s493 = int_to_ptr.vmem [resolvable:$true] %s492
      %498 = dma.vmem_to_hbm [thread:$0]  %s493, 256, %s7, [#allocation4], 128, 128, 8
    $region33: #{tpu_custom_call.1} parent=1 // pred_fallthru
      _
    // Predicated region
    $region34: #{tpu_custom_call.1} parent=1 // pred_check
      _
    $region35: #{tpu_custom_call.1} parent=1 // pred_check_branch
      %500 = sbr.rel (0) target = $region37
    $region36: #{tpu_custom_call.1} parent=1 // pred_region
      %501 = dma.done [#allocation4], 256
    $region37: #{tpu_custom_call.1} parent=1 // pred_fallthru
      _
    %502 = vsyncpa [#allocation4], 1

</llo_original>
